<compile_context>
chip_gen: v7x
topology: tpu7x:2x2x1
jax: 0.10.0
libtpu: 0.0.40
codegen_flags: <defaults>
</compile_context>

<pallas_src>
import functools

import jax
import jax.numpy as jnp
from jax.experimental import pallas as pl
from jax.experimental.pallas import tpu as pltpu


def _shifted_stack(v, kernel_size, dilation):
    """v: (C, T). Returns (K*C, T) where block k is v shifted right along the
    lane (time) axis by dilation*(K-1-k) with zero fill -- i.e. the operand of
    the k-th causal dilated tap."""
    C, T = v.shape
    blocks = []
    for k in range(kernel_size):
        s = dilation * (kernel_size - 1 - k)          # causal left-pad for tap k
        if s == 0:
            blocks.append(v)
        elif s >= T:
            blocks.append(jnp.zeros_like(v))
        else:
            blocks.append(jnp.concatenate(
                [jnp.zeros((C, s), v.dtype), v[:, :T - s]], axis=1))
    return jnp.concatenate(blocks, axis=0) if len(blocks) > 1 else blocks[0]


def temporal_block_kernel(x_ref, w1_ref, b1_ref, w2_ref, b2_ref, wd_ref, bd_ref,
                          out_ref, *, kernel_size, dilation, use_downsample):
    """One batch element: relu( relu(conv2(relu(conv1(x)))) + downsample(x) )."""
    x = x_ref[...]                                          # (Cin, T) bf16

    # ---- conv1 (causal dilated, K taps fused into one matmul) + ReLU --------
    xs = _shifted_stack(x, kernel_size, dilation)           # (K*Cin, T) bf16
    h1 = jnp.dot(w1_ref[...], xs, preferred_element_type=jnp.float32)
    h1 = jnp.maximum(h1 + b1_ref[...], 0.0)                 # (Cout, T) f32

    # ---- conv2 (causal dilated, fused) + ReLU -------------------------------
    hs = _shifted_stack(h1.astype(jnp.bfloat16), kernel_size, dilation)
    h2 = jnp.dot(w2_ref[...], hs, preferred_element_type=jnp.float32)
    h2 = jnp.maximum(h2 + b2_ref[...], 0.0)                 # (Cout, T) f32

    # ---- residual: 1x1 downsample conv (Cin != Cout) or identity ------------
    if use_downsample:
        res = jnp.dot(wd_ref[...], x, preferred_element_type=jnp.float32)
        res = res + bd_ref[...]
    else:
        res = x.astype(jnp.float32)

    out_ref[...] = jnp.maximum(h2 + res, 0.0)


def temporal_block_forward(x, w1, b1, w2, b2, wd, bd, *,
                           kernel_size, stride, dilation, padding):
    """PyTorch layouts: x (B,Cin,T); w1 (Cout,Cin,K); w2 (Cout,Cout,K);
    wd (Cout,Cin,1) or None; biases (Cout,).  Returns (B,Cout,T) float32."""
    assert stride == 1, "TCN TemporalBlock is used with stride=1"
    assert padding == dilation * (kernel_size - 1), \
        "chomped conv output length equals input length only for this padding"
    B, Cin, T = x.shape
    Cout = w1.shape[0]
    K = kernel_size
    use_downsample = wd is not None
    if not use_downsample:
        assert Cin == Cout
        wd = jnp.zeros((Cout, Cin, 1), jnp.float32)   # unused by the kernel
        bd = jnp.zeros((Cout,), jnp.float32)

    # bf16 matmul operands (f32 accumulation in-kernel).  Weights flattened
    # tap-major so each conv is a single (Cout, K*C) @ (K*C, T) matmul.
    xb = x.astype(jnp.bfloat16)
    w1f = jnp.transpose(w1, (0, 2, 1)).reshape(Cout, K * Cin).astype(jnp.bfloat16)
    w2f = jnp.transpose(w2, (0, 2, 1)).reshape(Cout, K * Cout).astype(jnp.bfloat16)
    wdf = wd[:, :, 0].astype(jnp.bfloat16)                  # (Cout, Cin)
    b1c = b1.reshape(Cout, 1).astype(jnp.float32)
    b2c = b2.reshape(Cout, 1).astype(jnp.float32)
    bdc = bd.reshape(Cout, 1).astype(jnp.float32)

    kernel = functools.partial(temporal_block_kernel, kernel_size=K,
                               dilation=dilation, use_downsample=use_downsample)

    # TODO(synk): for long sequences, add a T-tile grid axis with a 2*padding
    # input halo (recomputing the halo of h1) so VMEM stays bounded on v7x
    # (64 MiB) and both v7x TensorCores get work even when B is 1.
    return pl.pallas_call(
        kernel,
        out_shape=jax.ShapeDtypeStruct((B, Cout, T), jnp.float32),
        grid=(B,),
        in_specs=[
            pl.BlockSpec((None, Cin, T), lambda b: (b, 0, 0)),      # x (bf16)
            pl.BlockSpec((Cout, K * Cin), lambda b: (0, 0)),        # w1 flat
            pl.BlockSpec((Cout, 1), lambda b: (0, 0)),              # b1
            pl.BlockSpec((Cout, K * Cout), lambda b: (0, 0)),       # w2 flat
            pl.BlockSpec((Cout, 1), lambda b: (0, 0)),              # b2
            pl.BlockSpec((Cout, Cin), lambda b: (0, 0)),            # wd (1x1)
            pl.BlockSpec((Cout, 1), lambda b: (0, 0)),              # bd
        ],
        out_specs=pl.BlockSpec((None, Cout, T), lambda b: (b, 0, 0)),
        compiler_params=pltpu.CompilerParams(
            dimension_semantics=("parallel",),
            vmem_limit_bytes=32 * 1024 * 1024),
    )(xb, w1f, b1c, w2f, b2c, wdf, bdc)


# ----------------------------- parameter setup -------------------------------
def weight_norm_weight(v, g):
    """PyTorch weight_norm(dim=0): w[o] = g[o] * v[o] / ||v[o]||_2."""
    norm = jnp.sqrt(jnp.sum(v * v, axis=(1, 2), keepdims=True))
    return g[:, None, None] * v / norm


# ----------------------------- pure-JAX reference ----------------------------
def reference_forward(x, w1, b1, w2, b2, wd, bd, *, stride, padding, dilation):
    def conv(inp, w, b, p, d):
        y = jax.lax.conv_general_dilated(
            inp, w, window_strides=(stride,), padding=[(p, p)],
            rhs_dilation=(d,), dimension_numbers=("NCH", "OIH", "NCH"))
        return y + b[None, :, None]

    def chomp(y):
        return y[:, :, :-padding] if padding > 0 else y

    out = jnp.maximum(chomp(conv(x, w1, b1, padding, dilation)), 0.0)   # conv1
    out = jnp.maximum(chomp(conv(out, w2, b2, padding, dilation)), 0.0) # conv2
    res = conv(x, wd, bd, 0, 1) if wd is not None else x                # downsample
    return jnp.maximum(out + res, 0.0)                                  # relu


if __name__ == "__main__":
    # module config: n_inputs=4, n_outputs=8, kernel_size=3, stride=1,
    # dilation=2, padding=(3-1)*2=4  -> downsample (1x1 conv) is present.
    B, Cin, Cout, T = 2, 4, 8, 16
    K, stride, dilation = 3, 1, 2
    padding = (K - 1) * dilation

    key = jax.random.PRNGKey(0)
    ks = jax.random.split(key, 9)
    # weight_norm parametrization (v, g), deterministic init
    v1 = 0.01 * jax.random.normal(ks[0], (Cout, Cin, K), jnp.float32)
    g1 = 1.0 + 0.1 * jax.random.normal(ks[1], (Cout,), jnp.float32)
    b1 = 0.1 * jax.random.normal(ks[2], (Cout,), jnp.float32)
    v2 = 0.01 * jax.random.normal(ks[3], (Cout, Cout, K), jnp.float32)
    g2 = 1.0 + 0.1 * jax.random.normal(ks[4], (Cout,), jnp.float32)
    b2 = 0.1 * jax.random.normal(ks[5], (Cout,), jnp.float32)
    wd = 0.01 * jax.random.normal(ks[6], (Cout, Cin, 1), jnp.float32)  # downsample
    bd = 0.1 * jax.random.normal(ks[7], (Cout,), jnp.float32)
    x = jax.random.normal(ks[8], (B, Cin, T), jnp.float32)

    # effective conv weights after weight_norm (PyTorch layout (Cout, Cin, K))
    w1 = weight_norm_weight(v1, g1)
    w2 = weight_norm_weight(v2, g2)

    out = temporal_block_forward(
        x, w1, b1, w2, b2, wd, bd,
        kernel_size=K, stride=stride, dilation=dilation, padding=padding)
    out = jax.block_until_ready(out)

    ref = reference_forward(x, w1, b1, w2, b2, wd, bd,
                            stride=stride, padding=padding, dilation=dilation)
    assert out.shape == (B, Cout, T)
    # bf16 matmul operands with f32 accumulation -> loosened tolerance vs the
    # f32 reference (estimated max abs error ~1e-2 at these magnitudes).
    assert jnp.allclose(out, ref, atol=3e-2, rtol=3e-2), (
        "mismatch vs reference: max err "
        f"{float(jnp.max(jnp.abs(out - ref)))}")
    print("KERNEL_OK")
</pallas_src>

<mosaic_0001>
module attributes {stable_mosaic.version = 11 : i64} {
  func.func @temporal_block_kernel(%arg0: i32, %arg1: memref<1x4x16xbf16, #tpu.memory_space<vmem>>, %arg2: memref<8x12xbf16, #tpu.memory_space<vmem>>, %arg3: memref<8x1xf32, #tpu.memory_space<vmem>>, %arg4: memref<8x24xbf16, #tpu.memory_space<vmem>>, %arg5: memref<8x1xf32, #tpu.memory_space<vmem>>, %arg6: memref<8x4xbf16, #tpu.memory_space<vmem>>, %arg7: memref<8x1xf32, #tpu.memory_space<vmem>>, %arg8: memref<1x8x16xf32, #tpu.memory_space<vmem>>) attributes {dimension_semantics = [#tpu.dimension_semantics<parallel>], iteration_bounds = array<i64: 2>, scalar_prefetch = 0 : i64, scratch_operands = 0 : i64, tpu.core_type = #tpu.core_type<tc>, window_params = [{transform_indices = @transform_0, window_bounds = array<i64: 1, 4, 16>}, {pipeline_mode = #tpu.pipeline_mode<synchronous>, transform_indices = @transform_1, window_bounds = array<i64: 8, 12>}, {pipeline_mode = #tpu.pipeline_mode<synchronous>, transform_indices = @transform_2, window_bounds = array<i64: 8, 1>}, {pipeline_mode = #tpu.pipeline_mode<synchronous>, transform_indices = @transform_3, window_bounds = array<i64: 8, 24>}, {pipeline_mode = #tpu.pipeline_mode<synchronous>, transform_indices = @transform_4, window_bounds = array<i64: 8, 1>}, {pipeline_mode = #tpu.pipeline_mode<synchronous>, transform_indices = @transform_5, window_bounds = array<i64: 8, 4>}, {pipeline_mode = #tpu.pipeline_mode<synchronous>, transform_indices = @transform_6, window_bounds = array<i64: 8, 1>}, {transform_indices = @transform_7, window_bounds = array<i64: 1, 8, 16>}]} {
    %c0 = arith.constant 0 : index
    %c0_0 = arith.constant 0 : index
    %c0_1 = arith.constant 0 : index
    %0 = vector.load %arg1[%c0, %c0_0, %c0_1] : memref<1x4x16xbf16, #tpu.memory_space<vmem>>, vector<1x4x16xbf16>
    %1 = vector.shape_cast %0 : vector<1x4x16xbf16> to vector<4x16xbf16>
    %cst = arith.constant 0.000000e+00 : bf16
    %2 = vector.broadcast %cst : bf16 to vector<4x4xbf16>
    %3 = vector.extract_strided_slice %1 {offsets = [0, 0], sizes = [4, 12], strides = [1, 1]} : vector<4x16xbf16> to vector<4x12xbf16>
    %4 = tpu.concatenate %2, %3 in 1 : vector<4x4xbf16>, vector<4x12xbf16> -> vector<4x16xbf16>
    %cst_2 = arith.constant 0.000000e+00 : bf16
    %5 = vector.broadcast %cst_2 : bf16 to vector<4x2xbf16>
    %6 = vector.extract_strided_slice %1 {offsets = [0, 0], sizes = [4, 14], strides = [1, 1]} : vector<4x16xbf16> to vector<4x14xbf16>
    %7 = tpu.concatenate %5, %6 in 1 : vector<4x2xbf16>, vector<4x14xbf16> -> vector<4x16xbf16>
    %8 = tpu.concatenate %4, %7, %1 in 0 : vector<4x16xbf16>, vector<4x16xbf16>, vector<4x16xbf16> -> vector<12x16xbf16>
    %c0_3 = arith.constant 0 : index
    %c0_4 = arith.constant 0 : index
    %9 = vector.load %arg2[%c0_3, %c0_4] : memref<8x12xbf16, #tpu.memory_space<vmem>>, vector<8x12xbf16>
    %cst_5 = arith.constant dense<0.000000e+00> : vector<8x16xf32>
    %10 = tpu.matmul %9, %8, %cst_5 {dimension_numbers = #tpu.dot_dimension_numbers<[1], [0], [0], [1], [0, 0, 1, 1], [], []>} : vector<8x12xbf16>, vector<12x16xbf16>, vector<8x16xf32> -> vector<8x16xf32>
    %c0_6 = arith.constant 0 : index
    %c0_7 = arith.constant 0 : index
    %11 = vector.load %arg3[%c0_6, %c0_7] : memref<8x1xf32, #tpu.memory_space<vmem>>, vector<8x1xf32>
    %12 = vector.broadcast %11 : vector<8x1xf32> to vector<8x16xf32>
    %13 = arith.addf %10, %12 : vector<8x16xf32>
    %cst_8 = arith.constant 0.000000e+00 : f32
    %14 = vector.broadcast %cst_8 : f32 to vector<8x16xf32>
    %15 = arith.maximumf %13, %14 : vector<8x16xf32>
    %16 = arith.truncf %15 : vector<8x16xf32> to vector<8x16xbf16>
    %cst_9 = arith.constant 0.000000e+00 : bf16
    %17 = vector.broadcast %cst_9 : bf16 to vector<8x4xbf16>
    %18 = vector.extract_strided_slice %16 {offsets = [0, 0], sizes = [8, 12], strides = [1, 1]} : vector<8x16xbf16> to vector<8x12xbf16>
    %19 = tpu.concatenate %17, %18 in 1 : vector<8x4xbf16>, vector<8x12xbf16> -> vector<8x16xbf16>
    %cst_10 = arith.constant 0.000000e+00 : bf16
    %20 = vector.broadcast %cst_10 : bf16 to vector<8x2xbf16>
    %21 = vector.extract_strided_slice %16 {offsets = [0, 0], sizes = [8, 14], strides = [1, 1]} : vector<8x16xbf16> to vector<8x14xbf16>
    %22 = tpu.concatenate %20, %21 in 1 : vector<8x2xbf16>, vector<8x14xbf16> -> vector<8x16xbf16>
    %23 = tpu.concatenate %19, %22, %16 in 0 : vector<8x16xbf16>, vector<8x16xbf16>, vector<8x16xbf16> -> vector<24x16xbf16>
    %c0_11 = arith.constant 0 : index
    %c0_12 = arith.constant 0 : index
    %24 = vector.load %arg4[%c0_11, %c0_12] : memref<8x24xbf16, #tpu.memory_space<vmem>>, vector<8x24xbf16>
    %cst_13 = arith.constant dense<0.000000e+00> : vector<8x16xf32>
    %25 = tpu.matmul %24, %23, %cst_13 {dimension_numbers = #tpu.dot_dimension_numbers<[1], [0], [0], [1], [0, 0, 1, 1], [], []>} : vector<8x24xbf16>, vector<24x16xbf16>, vector<8x16xf32> -> vector<8x16xf32>
    %c0_14 = arith.constant 0 : index
    %c0_15 = arith.constant 0 : index
    %26 = vector.load %arg5[%c0_14, %c0_15] : memref<8x1xf32, #tpu.memory_space<vmem>>, vector<8x1xf32>
    %27 = vector.broadcast %26 : vector<8x1xf32> to vector<8x16xf32>
    %28 = arith.addf %25, %27 : vector<8x16xf32>
    %cst_16 = arith.constant 0.000000e+00 : f32
    %29 = vector.broadcast %cst_16 : f32 to vector<8x16xf32>
    %30 = arith.maximumf %28, %29 : vector<8x16xf32>
    %c0_17 = arith.constant 0 : index
    %c0_18 = arith.constant 0 : index
    %31 = vector.load %arg6[%c0_17, %c0_18] : memref<8x4xbf16, #tpu.memory_space<vmem>>, vector<8x4xbf16>
    %cst_19 = arith.constant dense<0.000000e+00> : vector<8x16xf32>
    %32 = tpu.matmul %31, %1, %cst_19 {dimension_numbers = #tpu.dot_dimension_numbers<[1], [0], [0], [1], [0, 0, 1, 1], [], []>} : vector<8x4xbf16>, vector<4x16xbf16>, vector<8x16xf32> -> vector<8x16xf32>
    %c0_20 = arith.constant 0 : index
    %c0_21 = arith.constant 0 : index
    %33 = vector.load %arg7[%c0_20, %c0_21] : memref<8x1xf32, #tpu.memory_space<vmem>>, vector<8x1xf32>
    %34 = vector.broadcast %33 : vector<8x1xf32> to vector<8x16xf32>
    %35 = arith.addf %32, %34 : vector<8x16xf32>
    %36 = arith.addf %30, %35 : vector<8x16xf32>
    %cst_22 = arith.constant 0.000000e+00 : f32
    %37 = vector.broadcast %cst_22 : f32 to vector<8x16xf32>
    %38 = arith.maximumf %36, %37 : vector<8x16xf32>
    %c0_23 = arith.constant 0 : index
    %c0_24 = arith.constant 0 : index
    %c0_25 = arith.constant 0 : index
    %39 = vector.load %arg8[%c0_23, %c0_24, %c0_25] : memref<1x8x16xf32, #tpu.memory_space<vmem>>, vector<1x8x16xf32>
    %40 = vector.shape_cast %39 : vector<1x8x16xf32> to vector<8x16xf32>
    %41 = vector.shape_cast %38 : vector<8x16xf32> to vector<1x8x16xf32>
    tpu.vector_store %arg8[%c0_23, %c0_24, %c0_25], %41 {strides = array<i32>} : memref<1x8x16xf32, #tpu.memory_space<vmem>>, vector<1x8x16xf32>,
    return
  }
  func.func @transform_0(%arg0: i32) -> (i32, i32, i32) {
    %c0_i32 = arith.constant 0 : i32
    %c0_i32_0 = arith.constant 0 : i32
    %c0_i32_1 = arith.constant 0 : i32
    return %arg0, %c0_i32, %c0_i32_0 : i32, i32, i32
  }
  func.func @transform_1(%arg0: i32) -> (i32, i32) {
    %c0_i32 = arith.constant 0 : i32
    %c0_i32_0 = arith.constant 0 : i32
    %c0_i32_1 = arith.constant 0 : i32
    return %c0_i32, %c0_i32_0 : i32, i32
  }
  func.func @transform_2(%arg0: i32) -> (i32, i32) {
    %c0_i32 = arith.constant 0 : i32
    %c0_i32_0 = arith.constant 0 : i32
    %c0_i32_1 = arith.constant 0 : i32
    return %c0_i32, %c0_i32_0 : i32, i32
  }
  func.func @transform_3(%arg0: i32) -> (i32, i32) {
    %c0_i32 = arith.constant 0 : i32
    %c0_i32_0 = arith.constant 0 : i32
    %c0_i32_1 = arith.constant 0 : i32
    return %c0_i32, %c0_i32_0 : i32, i32
  }
  func.func @transform_4(%arg0: i32) -> (i32, i32) {
    %c0_i32 = arith.constant 0 : i32
    %c0_i32_0 = arith.constant 0 : i32
    %c0_i32_1 = arith.constant 0 : i32
    return %c0_i32, %c0_i32_0 : i32, i32
  }
  func.func @transform_5(%arg0: i32) -> (i32, i32) {
    %c0_i32 = arith.constant 0 : i32
    %c0_i32_0 = arith.constant 0 : i32
    %c0_i32_1 = arith.constant 0 : i32
    return %c0_i32, %c0_i32_0 : i32, i32
  }
  func.func @transform_6(%arg0: i32) -> (i32, i32) {
    %c0_i32 = arith.constant 0 : i32
    %c0_i32_0 = arith.constant 0 : i32
    %c0_i32_1 = arith.constant 0 : i32
    return %c0_i32, %c0_i32_0 : i32, i32
  }
  func.func @transform_7(%arg0: i32) -> (i32, i32, i32) {
    %c0_i32 = arith.constant 0 : i32
    %c0_i32_0 = arith.constant 0 : i32
    %c0_i32_1 = arith.constant 0 : i32
    return %arg0, %c0_i32, %c0_i32_0 : i32, i32, i32
  }
}

</mosaic_0001>

<llo_original>
// kernel: tpu_custom_call.1
$region0: #{tpu_custom_call.1}
  #allocation0 [shape = 'u32[]', space=smem, size = 0x4, offset = 0x4, fixed_abs, tag = 'smem constant byte address 0x4 - core index']
  #allocation1 [shape = 'u32[144,128]{1,0:T(1,128)}', space=vmem, size = 0x12000, scoped, tag = 'internal scratch']
  %s0 = inlined_call_operand.vmem [shape: bf16[2,4,16], index: 0, kind: input, shape index: {}]
  %s1 = inlined_call_operand.vmem [shape: bf16[8,12], index: 1, kind: input, shape index: {}]
  %s2 = inlined_call_operand.vmem [shape: f32[8,1], index: 2, kind: input, shape index: {}]
  %s3 = inlined_call_operand.vmem [shape: bf16[8,24], index: 3, kind: input, shape index: {}]
  %s4 = inlined_call_operand.vmem [shape: f32[8,1], index: 4, kind: input, shape index: {}]
  %s5 = inlined_call_operand.vmem [shape: bf16[8,4], index: 5, kind: input, shape index: {}]
  %s6 = inlined_call_operand.vmem [shape: f32[8,1], index: 6, kind: input, shape index: {}]
  %s7 = inlined_call_operand.hbm [shape: f32[2,8,16], index: 7, kind: output, shape index: {}]
  %s8 = sld [smem:[#allocation0]]
  $region61: #{tpu_custom_call.1} parent=0
    _
  %s10 = ssub.s32 1, %s8
  %s11 = scalar_select 0, %s10, %s8
  $region1: #{tpu_custom_call.1} parent=0
    #allocation2 [shape = 'u8[8192]{0}', space=vmem, size = 0x2000, scoped, tag = 'output window, operand 0']
    #allocation3 [shape = 's32[2]{0}', space=sflag, size = 0x8, scoped, tag = 'scoped memory for tpu_custom_call.1']
    %12 = vsyncpa [#allocation3], 0
    %s13 = scalar_lea.sflag [#allocation3], 1
    %14 = vsyncpa %s13, 0
    loop: start=0, step=1, limit=4
    $region2: #{tpu_custom_call.1} parent=1 // loop_pre_header
      _
    $region3: #{tpu_custom_call.1} parent=1 // loop_header
      %s16 = sphi 0, %s20
      %p17 = scmp.ge.s32.totalorder %s16, 4
      %s26 = sphi 0, %s28
      %s29 = sphi 0, %s26
      %s30 = sphi 0, %s29
      %s46 = sphi 0, %s30
      %s50 = sphi 0, %s50
      %s52 = sphi 0, %s50
      %s53 = sphi 0, %s52
      %s67 = sphi 0, %s53
      %s71 = sphi 0, %s71
      %s73 = sphi 0, %s71
      %s74 = sphi 0, %s73
      %s88 = sphi 0, %s74
      %s92 = sphi 0, %s92
      %s94 = sphi 0, %s92
      %s95 = sphi 0, %s94
      %s109 = sphi 0, %s95
      %s113 = sphi 0, %s113
      %s115 = sphi 0, %s113
      %s116 = sphi 0, %s115
      %s130 = sphi 0, %s116
      %s134 = sphi 0, %s134
      %s136 = sphi 0, %s134
      %s137 = sphi 0, %s136
      %s151 = sphi 0, %s137
      %s155 = sphi 0, %s155
      %s157 = sphi 0, %s155
      %s158 = sphi 0, %s157
      %s172 = sphi 0, %s158
      %s178 = sphi 0, %s180
      %s181 = sphi 0, %s178
      %s182 = sphi 0, %s181
      %s198 = sphi 0, %s182
    $region4: #{tpu_custom_call.1} parent=1 // loop_header_branch
      %19 = sbr.rel (%p17) target = $region8
    $region5: #{tpu_custom_call.1} parent=1 // loop_body
      %s21 = ssub.s32 %s16, 1
      %s22 = ssub.s32 %s16, 2
      %s23 = sadd.s32 %s16, 1
      %s24 = ssub.s32 %s16, %s23
      %p25 = scmp.eq.s32.totalorder %s24, 0
      %s27 = sadd.s32 %s26, 1
      %s28 = scalar_select %p25, %s26, %s27
      %p31 = pneg %p25
      %p32 = scmp.eq.s32.totalorder %s16, 1
      %p33 = por %p31, %p32
      %p34 = scmp.ne.s32.totalorder %s26, %s29
      %p35 = scmp.eq.s32.totalorder %s16, 0
      %p36 = por %p34, %p35
      %p37 = scmp.ne.s32.totalorder %s26, %s29
      %p38 = scmp.eq.s32.totalorder %s21, 1
      %p39 = por %p37, %p38
      %p40 = scmp.ne.s32.totalorder %s29, %s30
      %p41 = scmp.eq.s32.totalorder %s21, 0
      %p42 = por %p40, %p41
      %p43 = scmp.ne.s32.totalorder %s29, %s30
      %p44 = scmp.eq.s32.totalorder %s22, 1
      %p45 = por %p43, %p44
      %p47 = scmp.ne.s32.totalorder %s30, %s46
      %p48 = scmp.eq.s32.totalorder %s22, 0
      %p49 = por %p47, %p48
      %s51 = sadd.s32 %s50, 1
      %p54 = scmp.eq.s32.totalorder %s16, 1
      %p55 = scmp.ne.s32.totalorder %s50, %s52
      %p56 = scmp.eq.s32.totalorder %s16, 0
      %p57 = por %p55, %p56
      %p58 = scmp.ne.s32.totalorder %s50, %s52
      %p59 = scmp.eq.s32.totalorder %s21, 1
      %p60 = por %p58, %p59
      %p61 = scmp.ne.s32.totalorder %s52, %s53
      %p62 = scmp.eq.s32.totalorder %s21, 0
      %p63 = por %p61, %p62
      %p64 = scmp.ne.s32.totalorder %s52, %s53
      %p65 = scmp.eq.s32.totalorder %s22, 1
      %p66 = por %p64, %p65
      %p68 = scmp.ne.s32.totalorder %s53, %s67
      %p69 = scmp.eq.s32.totalorder %s22, 0
      %p70 = por %p68, %p69
      %s72 = sadd.s32 %s71, 1
      %p75 = scmp.eq.s32.totalorder %s16, 1
      %p76 = scmp.ne.s32.totalorder %s71, %s73
      %p77 = scmp.eq.s32.totalorder %s16, 0
      %p78 = por %p76, %p77
      %p79 = scmp.ne.s32.totalorder %s71, %s73
      %p80 = scmp.eq.s32.totalorder %s21, 1
      %p81 = por %p79, %p80
      %p82 = scmp.ne.s32.totalorder %s73, %s74
      %p83 = scmp.eq.s32.totalorder %s21, 0
      %p84 = por %p82, %p83
      %p85 = scmp.ne.s32.totalorder %s73, %s74
      %p86 = scmp.eq.s32.totalorder %s22, 1
      %p87 = por %p85, %p86
      %p89 = scmp.ne.s32.totalorder %s74, %s88
      %p90 = scmp.eq.s32.totalorder %s22, 0
      %p91 = por %p89, %p90
      %s93 = sadd.s32 %s92, 1
      %p96 = scmp.eq.s32.totalorder %s16, 1
      %p97 = scmp.ne.s32.totalorder %s92, %s94
      %p98 = scmp.eq.s32.totalorder %s16, 0
      %p99 = por %p97, %p98
      %p100 = scmp.ne.s32.totalorder %s92, %s94
      %p101 = scmp.eq.s32.totalorder %s21, 1
      %p102 = por %p100, %p101
      %p103 = scmp.ne.s32.totalorder %s94, %s95
      %p104 = scmp.eq.s32.totalorder %s21, 0
      %p105 = por %p103, %p104
      %p106 = scmp.ne.s32.totalorder %s94, %s95
      %p107 = scmp.eq.s32.totalorder %s22, 1
      %p108 = por %p106, %p107
      %p110 = scmp.ne.s32.totalorder %s95, %s109
      %p111 = scmp.eq.s32.totalorder %s22, 0
      %p112 = por %p110, %p111
      %s114 = sadd.s32 %s113, 1
      %p117 = scmp.eq.s32.totalorder %s16, 1
      %p118 = scmp.ne.s32.totalorder %s113, %s115
      %p119 = scmp.eq.s32.totalorder %s16, 0
      %p120 = por %p118, %p119
      %p121 = scmp.ne.s32.totalorder %s113, %s115
      %p122 = scmp.eq.s32.totalorder %s21, 1
      %p123 = por %p121, %p122
      %p124 = scmp.ne.s32.totalorder %s115, %s116
      %p125 = scmp.eq.s32.totalorder %s21, 0
      %p126 = por %p124, %p125
      %p127 = scmp.ne.s32.totalorder %s115, %s116
      %p128 = scmp.eq.s32.totalorder %s22, 1
      %p129 = por %p127, %p128
      %p131 = scmp.ne.s32.totalorder %s116, %s130
      %p132 = scmp.eq.s32.totalorder %s22, 0
      %p133 = por %p131, %p132
      %s135 = sadd.s32 %s134, 1
      %p138 = scmp.eq.s32.totalorder %s16, 1
      %p139 = scmp.ne.s32.totalorder %s134, %s136
      %p140 = scmp.eq.s32.totalorder %s16, 0
      %p141 = por %p139, %p140
      %p142 = scmp.ne.s32.totalorder %s134, %s136
      %p143 = scmp.eq.s32.totalorder %s21, 1
      %p144 = por %p142, %p143
      %p145 = scmp.ne.s32.totalorder %s136, %s137
      %p146 = scmp.eq.s32.totalorder %s21, 0
      %p147 = por %p145, %p146
      %p148 = scmp.ne.s32.totalorder %s136, %s137
      %p149 = scmp.eq.s32.totalorder %s22, 1
      %p150 = por %p148, %p149
      %p152 = scmp.ne.s32.totalorder %s137, %s151
      %p153 = scmp.eq.s32.totalorder %s22, 0
      %p154 = por %p152, %p153
      %s156 = sadd.s32 %s155, 1
      %p159 = scmp.eq.s32.totalorder %s16, 1
      %p160 = scmp.ne.s32.totalorder %s155, %s157
      %p161 = scmp.eq.s32.totalorder %s16, 0
      %p162 = por %p160, %p161
      %p163 = scmp.ne.s32.totalorder %s155, %s157
      %p164 = scmp.eq.s32.totalorder %s21, 1
      %p165 = por %p163, %p164
      %p166 = scmp.ne.s32.totalorder %s157, %s158
      %p167 = scmp.eq.s32.totalorder %s21, 0
      %p168 = por %p166, %p167
      %p169 = scmp.ne.s32.totalorder %s157, %s158
      %p170 = scmp.eq.s32.totalorder %s22, 1
      %p171 = por %p169, %p170
      %p173 = scmp.ne.s32.totalorder %s158, %s172
      %p174 = scmp.eq.s32.totalorder %s22, 0
      %p175 = por %p173, %p174
      %s176 = ssub.s32 %s16, %s23
      %p177 = scmp.eq.s32.totalorder %s176, 0
      %s179 = sadd.s32 %s178, 1
      %s180 = scalar_select %p177, %s178, %s179
      %p183 = pneg %p177
      %p184 = scmp.eq.s32.totalorder %s16, 1
      %p185 = por %p183, %p184
      %p186 = scmp.ne.s32.totalorder %s178, %s181
      %p187 = scmp.eq.s32.totalorder %s16, 0
      %p188 = por %p186, %p187
      %p189 = scmp.ne.s32.totalorder %s178, %s181
      %p190 = scmp.eq.s32.totalorder %s21, 1
      %p191 = por %p189, %p190
      %p192 = scmp.ne.s32.totalorder %s181, %s182
      %p193 = scmp.eq.s32.totalorder %s21, 0
      %p194 = por %p192, %p193
      %p195 = scmp.ne.s32.totalorder %s181, %s182
      %p196 = scmp.eq.s32.totalorder %s22, 1
      %p197 = por %p195, %p196
      %p199 = scmp.ne.s32.totalorder %s182, %s198
      %p200 = scmp.eq.s32.totalorder %s22, 0
      %p201 = por %p199, %p200
      %p202 = scmp.le.s32.totalorder 1, %s16
      %p203 = scmp.lt.s32.totalorder %s16, 3
      %p204 = pnand %p202, %p203
      %p205 = pneg %p204
      // Predicated region
      $region9: #{tpu_custom_call.1} parent=5 // pred_check
        _
      $region10: #{tpu_custom_call.1} parent=5 // pred_check_branch
        %207 = sbr.rel (%p204) target = $region12
      $region11: #{tpu_custom_call.1} parent=5 // pred_region
        %s208 = ssub.s32 %s16, 1
        // Predicated region
        $region13: #{tpu_custom_call.1} parent=11 // pred_check
          %p209 = pneg %p63
        $region14: #{tpu_custom_call.1} parent=11 // pred_check_branch
          %211 = sbr.rel (%p209) target = $region16
        $region15: #{tpu_custom_call.1} parent=11 // pred_region
          _
        $region16: #{tpu_custom_call.1} parent=11 // pred_fallthru
          _
        // Predicated region
        $region17: #{tpu_custom_call.1} parent=11 // pred_check
          %p212 = pneg %p84
        $region18: #{tpu_custom_call.1} parent=11 // pred_check_branch
          %214 = sbr.rel (%p212) target = $region20
        $region19: #{tpu_custom_call.1} parent=11 // pred_region
          _
        $region20: #{tpu_custom_call.1} parent=11 // pred_fallthru
          _
        // Predicated region
        $region21: #{tpu_custom_call.1} parent=11 // pred_check
          %p215 = pneg %p105
        $region22: #{tpu_custom_call.1} parent=11 // pred_check_branch
          %217 = sbr.rel (%p215) target = $region24
        $region23: #{tpu_custom_call.1} parent=11 // pred_region
          _
        $region24: #{tpu_custom_call.1} parent=11 // pred_fallthru
          _
        // Predicated region
        $region25: #{tpu_custom_call.1} parent=11 // pred_check
          %p218 = pneg %p126
        $region26: #{tpu_custom_call.1} parent=11 // pred_check_branch
          %220 = sbr.rel (%p218) target = $region28
        $region27: #{tpu_custom_call.1} parent=11 // pred_region
          _
        $region28: #{tpu_custom_call.1} parent=11 // pred_fallthru
          _
        // Predicated region
        $region29: #{tpu_custom_call.1} parent=11 // pred_check
          %p221 = pneg %p147
        $region30: #{tpu_custom_call.1} parent=11 // pred_check_branch
          %223 = sbr.rel (%p221) target = $region32
        $region31: #{tpu_custom_call.1} parent=11 // pred_region
          _
        $region32: #{tpu_custom_call.1} parent=11 // pred_fallthru
          _
        // Predicated region
        $region33: #{tpu_custom_call.1} parent=11 // pred_check
          %p224 = pneg %p168
        $region34: #{tpu_custom_call.1} parent=11 // pred_check_branch
          %226 = sbr.rel (%p224) target = $region36
        $region35: #{tpu_custom_call.1} parent=11 // pred_region
          _
        $region36: #{tpu_custom_call.1} parent=11 // pred_fallthru
          _
      $region12: #{tpu_custom_call.1} parent=5 // pred_fallthru
        _
      %p227 = scmp.lt.s32.totalorder %s16, 2
      // Predicated region
      $region37: #{tpu_custom_call.1} parent=5 // pred_check
        %p228 = pneg %p227
      $region38: #{tpu_custom_call.1} parent=5 // pred_check_branch
        %230 = sbr.rel (%p228) target = $region40
      $region39: #{tpu_custom_call.1} parent=5 // pred_region
        // Predicated region
        $region41: #{tpu_custom_call.1} parent=39 // pred_check
          %p231 = pneg %p36
        $region42: #{tpu_custom_call.1} parent=39 // pred_check_branch
          %233 = sbr.rel (%p231) target = $region44
        $region43: #{tpu_custom_call.1} parent=39 // pred_region
          %p234 = scmp.lt.s32.totalorder %s16, 1
          %s235 = scalar_select %p234, %s16, 1
          %s236 = smul.addr %s235, 2
          %s237 = scalar_lea.vmem %s0, %s236
        $region44: #{tpu_custom_call.1} parent=39 // pred_fallthru
          _
      $region40: #{tpu_custom_call.1} parent=5 // pred_fallthru
        _
      %p238 = scmp.le.s32.totalorder 1, %s16
      %p239 = scmp.lt.s32.totalorder %s16, 3
      %p240 = pnand %p238, %p239
      %p241 = pneg %p240
      // Predicated region
      $region45: #{tpu_custom_call.1} parent=5 // pred_check
        _
      $region46: #{tpu_custom_call.1} parent=5 // pred_check_branch
        %243 = sbr.rel (%p240) target = $region48
      $region47: #{tpu_custom_call.1} parent=5 // pred_region
        %s244 = ssub.s32 %s16, 1
        %p245 = scmp.lt.s32.totalorder %s21, 1
        %s246 = scalar_select %p245, %s21, 1
        %s247 = smul.addr %s246, 2
        %s248 = scalar_lea.vmem %s0, %s247
        %p249 = pneg %p42
        %p250 = pneg %p39
        %p251 = pneg %p63
        %p252 = pneg %p60
        %p253 = pneg %p84
        %p254 = pneg %p81
        %p255 = pneg %p105
        %p256 = pneg %p102
        %p257 = pneg %p126
        %p258 = pneg %p123
        %p259 = pneg %p147
        %p260 = pneg %p144
        %p261 = pneg %p168
        %p262 = pneg %p165
        %p263 = pneg %p194
        %p264 = pneg %p191
        %s265 = sand.u32 %s181, 1
        %s266 = scalar_lea.sflag [#allocation3], %s265
        %s267 = sand.u32 %s181, 1
        %s268 = smul.addr %s267, 8
        %s269 = scalar_lea.vmem [#allocation2], %s268
        %p270 = scmp.lt.s32.totalorder %s21, 1
        %s271 = scalar_select %p270, %s21, 1
        %s272 = smul.addr %s271, 2
        %s273 = scalar_lea.vmem %s0, %s272
        %v275 = vld [vmem:[%s273] sm:$0x3]
        %v278 = vunpack.c.l.s4 1983009808
        %v279 = vunpack.c.0.s8 %v278
        %v280 = vlaneseq
        %v281 = vshrl.u32 %v280, 7
        %v282 = vsub.s32 %v279, %v281
        %v283 = vrot.slane %v275, %v282
        %284 = vrot.lane.b32.xlu0 %v283, 4
        %v285 = vpop.permute.xlu0 %284
        %vm286 = vcmask 31744
        %v289 = vsel %vm286, 0, %v285
        %290 = vrot.lane.b32.xlu0 %v283, 2
        %v291 = vpop.permute.xlu0 %290
        %vm292 = vcmask 15360
        %v294 = vsel %vm292, 0, %v291
        %v296 = vrot.slane %v294, 6
        %v297 = vcombine.low %v283, %v283
        %vm298 = vcmask 1041408
        %v300 = vsel %vm298, %v289, %v296
        %vm301 = vcmask 1043456
        %v303 = vsel %vm301, %v300, %v297
        %v304 = vld [vmem:[%s1] sm:$0xf]
        %v305 = vld [vmem:[%s2] sm:$0xff]
        %307 = vset.pattern.permute.xlu0 0
        %308 = vperm.xlu0 %307, %v305
        %v309 = vpop.permute.xlu0 %308
        %vm311 = vcmask 97280
        %v313 = vsel %vm311, %v304, 0
        %vm315 = vcmask 1045504
        %v316 = vsel %vm315, %v303, 0
        %318 = vmatprep.subr.bf16.mxu0 0
        %319 = vmatpush1.bf16.msra.mxu0 %v316
        %320 = vmatprep.subr.bf16.mxu0 0
        %321 = vmatpush1.bf16.msra.mxu0 0
        %322 = vmatprep.subr.bf16.mxu0 0
        %323 = vmatpush1.bf16.msra.mxu0 0
        %324 = vmatprep.subr.bf16.mxu0 0
        %325 = vmatpush1.bf16.msra.mxu0 0
        %326 = vmatprep.subr.bf16.mxu0 0
        %327 = vmatpush1.bf16.msra.mxu0 0
        %328 = vmatprep.subr.bf16.mxu0 0
        %329 = vmatpush1.bf16.msra.mxu0 0
        %330 = vmatprep.subr.bf16.mxu0 0
        %331 = vmatpush1.bf16.msra.mxu0 0
        %332 = vmatprep.subr.bf16.mxu0 0
        %333 = vmatpush1.bf16.msra.mxu0 0
        %334 = vmatprep.subr.bf16.mxu0 0
        %335 = vmatpush1.bf16.msra.mxu0 0
        %336 = vmatprep.subr.bf16.mxu0 0
        %337 = vmatpush1.bf16.msra.mxu0 0
        %338 = vmatprep.subr.bf16.mxu0 0
        %339 = vmatpush1.bf16.msra.mxu0 0
        %340 = vmatprep.subr.bf16.mxu0 0
        %341 = vmatpush1.bf16.msra.mxu0 0
        %342 = vmatprep.subr.bf16.mxu0 0
        %343 = vmatpush1.bf16.msra.mxu0 0
        %344 = vmatprep.subr.bf16.mxu0 0
        %345 = vmatpush1.bf16.msra.mxu0 0
        %346 = vmatprep.subr.bf16.mxu0 0
        %347 = vmatpush1.bf16.msra.mxu0 0
        %348 = vmatprep.subr.bf16.mxu0 0
        %349 = vmatpush1.bf16.msra.mxu0 0
        %350 = vmatprep.mubr.bf16.mxu0 0
        %351 = vmatmul.mubr.bf16.gmra.mrb[0].mxu0 %v313
        %v352 = vpop.f32.mrb[0].mxu0
        %v353 = vadd.f32 %v309, %v352
        %v354 = vpop.f32.mrb[0].mxu0
        %v355 = vpop.f32.mrb[0].mxu0
        %v356 = vpop.f32.mrb[0].mxu0
        %357 = vdwg.mxu0
        %v358 = vmax.f32 %v353, 0.0
        %v359 = vpack.c.bf16 %v358, %v358
        %361 = vrot.lane.b32.xlu0 %v359, 4
        %v362 = vpop.permute.xlu0 %361
        %v364 = vsel %vm286, 0, %v362
        %365 = vrot.lane.b32.xlu0 %v359, 2
        %v366 = vpop.permute.xlu0 %365
        %v368 = vsel %vm292, 0, %v366
        %v370 = vrot.slane %v368, 4
        %v372 = vsel %vm301, %v364, %v370
        %v374 = vld [vmem:[%s3] sm:$0xf]
        %v375 = vld [vmem:[%s4] sm:$0xff]
        %377 = vset.pattern.permute.xlu0 0
        %378 = vperm.xlu0 %377, %v375
        %v379 = vpop.permute.xlu0 %378
        %vm381 = vcmask 195584
        %v383 = vsel %vm381, %v374, 0
        %v386 = vsel %vm301, %v359, 0
        %388 = vmatprep.subr.bf16.mxu0 0
        %389 = vmatpush1.bf16.msra.mxu0 %v372
        %390 = vmatprep.subr.bf16.mxu0 0
        %391 = vmatpush1.bf16.msra.mxu0 %v386
        %392 = vmatprep.subr.bf16.mxu0 0
        %393 = vmatpush1.bf16.msra.mxu0 0
        %394 = vmatprep.subr.bf16.mxu0 0
        %395 = vmatpush1.bf16.msra.mxu0 0
        %396 = vmatprep.subr.bf16.mxu0 0
        %397 = vmatpush1.bf16.msra.mxu0 0
        %398 = vmatprep.subr.bf16.mxu0 0
        %399 = vmatpush1.bf16.msra.mxu0 0
        %400 = vmatprep.subr.bf16.mxu0 0
        %401 = vmatpush1.bf16.msra.mxu0 0
        %402 = vmatprep.subr.bf16.mxu0 0
        %403 = vmatpush1.bf16.msra.mxu0 0
        %404 = vmatprep.subr.bf16.mxu0 0
        %405 = vmatpush1.bf16.msra.mxu0 0
        %406 = vmatprep.subr.bf16.mxu0 0
        %407 = vmatpush1.bf16.msra.mxu0 0
        %408 = vmatprep.subr.bf16.mxu0 0
        %409 = vmatpush1.bf16.msra.mxu0 0
        %410 = vmatprep.subr.bf16.mxu0 0
        %411 = vmatpush1.bf16.msra.mxu0 0
        %412 = vmatprep.subr.bf16.mxu0 0
        %413 = vmatpush1.bf16.msra.mxu0 0
        %414 = vmatprep.subr.bf16.mxu0 0
        %415 = vmatpush1.bf16.msra.mxu0 0
        %416 = vmatprep.subr.bf16.mxu0 0
        %417 = vmatpush1.bf16.msra.mxu0 0
        %418 = vmatprep.subr.bf16.mxu0 0
        %419 = vmatpush1.bf16.msra.mxu0 0
        %420 = vmatprep.mubr.bf16.mxu0 0
        %421 = vmatmul.mubr.bf16.gmra.mrb[0].mxu0 %v383
        %v422 = vpop.f32.mrb[0].mxu0
        %v423 = vadd.f32 %v379, %v422
        %v424 = vpop.f32.mrb[0].mxu0
        %v425 = vpop.f32.mrb[0].mxu0
        %v426 = vpop.f32.mrb[0].mxu0
        %427 = vdwg.mxu0
        %v428 = vmax.f32 %v423, 0.0
        %v429 = vld [vmem:[%s5] sm:$0xf]
        %v430 = vld [vmem:[%s6] sm:$0xff]
        %432 = vset.pattern.permute.xlu0 0
        %433 = vperm.xlu0 %432, %v430
        %v434 = vpop.permute.xlu0 %433
        %v437 = vsel %vm286, %v429, 0
        %v440 = vsel %vm298, %v275, 0
        %442 = vmatprep.subr.bf16.mxu0 0
        %443 = vmatpush1.bf16.msra.mxu0 %v440
        %444 = vmatprep.subr.bf16.mxu0 0
        %445 = vmatpush1.bf16.msra.mxu0 0
        %446 = vmatprep.subr.bf16.mxu0 0
        %447 = vmatpush1.bf16.msra.mxu0 0
        %448 = vmatprep.subr.bf16.mxu0 0
        %449 = vmatpush1.bf16.msra.mxu0 0
        %450 = vmatprep.subr.bf16.mxu0 0
        %451 = vmatpush1.bf16.msra.mxu0 0
        %452 = vmatprep.subr.bf16.mxu0 0
        %453 = vmatpush1.bf16.msra.mxu0 0
        %454 = vmatprep.subr.bf16.mxu0 0
        %455 = vmatpush1.bf16.msra.mxu0 0
        %456 = vmatprep.subr.bf16.mxu0 0
        %457 = vmatpush1.bf16.msra.mxu0 0
        %458 = vmatprep.subr.bf16.mxu0 0
        %459 = vmatpush1.bf16.msra.mxu0 0
        %460 = vmatprep.subr.bf16.mxu0 0
        %461 = vmatpush1.bf16.msra.mxu0 0
        %462 = vmatprep.subr.bf16.mxu0 0
        %463 = vmatpush1.bf16.msra.mxu0 0
        %464 = vmatprep.subr.bf16.mxu0 0
        %465 = vmatpush1.bf16.msra.mxu0 0
        %466 = vmatprep.subr.bf16.mxu0 0
        %467 = vmatpush1.bf16.msra.mxu0 0
        %468 = vmatprep.subr.bf16.mxu0 0
        %469 = vmatpush1.bf16.msra.mxu0 0
        %470 = vmatprep.subr.bf16.mxu0 0
        %471 = vmatpush1.bf16.msra.mxu0 0
        %472 = vmatprep.subr.bf16.mxu0 0
        %473 = vmatpush1.bf16.msra.mxu0 0
        %474 = vmatprep.mubr.bf16.mxu0 0
        %475 = vmatmul.mubr.bf16.gmra.mrb[0].mxu0 %v437
        %v476 = vpop.f32.mrb[0].mxu0
        %v477 = vadd.f32 %v434, %v476
        %v478 = vpop.f32.mrb[0].mxu0
        %v479 = vpop.f32.mrb[0].mxu0
        %v480 = vpop.f32.mrb[0].mxu0
        %481 = vdwg.mxu0
        %v482 = vadd.f32 %v428, %v477
        %v483 = vmax.f32 %v482, 0.0
        %vm484 = vcmask 130048
        %485 = vst.msk [vmem:[%s269] sm:$0xff] %vm484, %v483
        %s486 = sand.u32 %s181, 1
        %s487 = scalar_lea.sflag [#allocation3], %s486
        %s488 = sand.u32 %s181, 1
        %s489 = smul.addr %s488, 8
        %s490 = scalar_lea.vmem [#allocation2], %s489
        // Predicated region
        $region49: #{tpu_custom_call.1} parent=47 // pred_check
          %p491 = pneg %p191
        $region50: #{tpu_custom_call.1} parent=47 // pred_check_branch
          %493 = sbr.rel (%p491) target = $region52
        $region51: #{tpu_custom_call.1} parent=47 // pred_region
          %s495 = ssub.s32 128, 128
          %496 = vsyncadd %s487, %s495
          %s497 = smul.addr %s21, 128
          %s498 = scalar_lea.hbm %s7, %s497
          %s500 = sshll.u32 %s490, 4
          %s501 = int_to_ptr.vmem [resolvable:$true] %s500
          %503 = dma.vmem_to_hbm [thread:$0]  %s501, 128, %s498, %s487
        $region52: #{tpu_custom_call.1} parent=47 // pred_fallthru
          _
      $region48: #{tpu_custom_call.1} parent=5 // pred_fallthru
        _
      %p504 = scmp.le.s32.totalorder 2, %s16
      // Predicated region
      $region53: #{tpu_custom_call.1} parent=5 // pred_check
        %p505 = pneg %p504
      $region54: #{tpu_custom_call.1} parent=5 // pred_check_branch
        %507 = sbr.rel (%p505) target = $region56
      $region55: #{tpu_custom_call.1} parent=5 // pred_region
        %s508 = ssub.s32 %s16, 2
        // Predicated region
        $region57: #{tpu_custom_call.1} parent=55 // pred_check
          %p509 = pneg %p197
        $region58: #{tpu_custom_call.1} parent=55 // pred_check_branch
          %511 = sbr.rel (%p509) target = $region60
        $region59: #{tpu_custom_call.1} parent=55 // pred_region
          %s512 = sand.u32 %s182, 1
          %s513 = scalar_lea.sflag [#allocation3], %s512
          %s514 = sand.u32 %s182, 1
          %s515 = smul.addr %s514, 8
          %s516 = scalar_lea.vmem [#allocation2], %s515
          %517 = dma.done %s513, 128
        $region60: #{tpu_custom_call.1} parent=55 // pred_fallthru
          _
      $region56: #{tpu_custom_call.1} parent=5 // pred_fallthru
        _
    $region6: #{tpu_custom_call.1} parent=1 // loop_footer
      %s20 = sadd.s32 1, %s16
    $region7: #{tpu_custom_call.1} parent=1 // loop_footer_branch
      %15 = sbr.rel target = $region3
    $region8: #{tpu_custom_call.1} parent=1 // loop_exit
      _
    %518 = vsyncpa [#allocation3], 1
    %s519 = scalar_lea.sflag [#allocation3], 1
    %520 = vsyncpa %s519, 1

</llo_original>
